<compile_context>
chip_gen: v7x
topology: tpu7x:2x2x1
jax: 0.10.0
libtpu: 0.0.40
codegen_flags: <defaults>
</compile_context>

<pallas_src>
import functools

import jax
import jax.numpy as jnp
from jax.experimental import pallas as pl
from jax.experimental.pallas import tpu as pltpu


def _loc_scale_fwd_kernel(x_ref, m_ref, inv_s_ref, o_ref, *, K, p, R):
    """One grid step.

    x_ref:     (TB, R*p)     R original batch rows packed per block row
    m_ref:     (1,  R*K*p)   m flattened (K,p) -> (K*p,) and tiled R times
    inv_s_ref: (1,  R*K*p)   exp(-log_s) flattened and tiled R times
    o_ref:     (TB, R*K*p)   lane-dense output block
    """
    x = x_ref[...]                                          # (TB, R*p)
    if R == 1:
        x_rep = jnp.tile(x, (1, K))                         # (TB, K*p)
    else:
        # For each packed batch row r, repeat its p-wide chunk K times so the
        # lane layout matches the flattened (K, p) parameter rows.
        parts = [jnp.tile(x[:, r * p:(r + 1) * p], (1, K)) for r in range(R)]
        x_rep = jnp.concatenate(parts, axis=-1)             # (TB, R*K*p)
    o_ref[...] = ((x_rep - m_ref[...]) * inv_s_ref[...]).astype(o_ref.dtype)


def location_scale_flow_forward(x, m, log_s, *, tile_rows=None,
                                target_tile_bytes=2 << 20):
    """Pallas implementation of LocationScaleFlow.forward.

    x:     (..., p)
    m:     (K, p)
    log_s: (K, p)
    returns (..., K, p), dtype = x.dtype
    """
    K, p = m.shape
    assert log_s.shape == (K, p)
    assert x.shape[-1] == p
    batch_shape = x.shape[:-1]
    out_dtype = x.dtype

    x2 = x.reshape(-1, p)
    N = x2.shape[0]

    # --- lane packing factor R: pack R batch rows along the lane axis so the
    #     output block's last dim reaches >= 128 lanes when K*p is small.
    L = K * p
    if L < 128 and 128 % L == 0:
        R = min(128 // L, 16)
    else:
        R = 1

    # --- tile size: output tile ~target_tile_bytes, rows a multiple of 8
    #     (fits comfortably in the 32 MiB scoped-VMEM default on v5e/v6e/v7x
    #     even double-buffered).
    itemsize = jnp.dtype(out_dtype).itemsize
    row_bytes = R * L * itemsize
    if tile_rows is None:
        tile_rows = max(8, (target_tile_bytes // row_bytes) // 8 * 8)
    needed_rows = pl.cdiv(N, R)
    tile_rows = min(int(tile_rows), max(8, pl.cdiv(needed_rows, 8) * 8))
    tile_rows = max(8, (tile_rows // 8) * 8)

    # --- pad the flat batch so it divides evenly into packed, tiled rows
    #     (padded rows are computed then sliced away).
    n_packed = pl.cdiv(needed_rows, tile_rows) * tile_rows
    N_pad = n_packed * R
    if N_pad != N:
        x2 = jnp.pad(x2, ((0, N_pad - N), (0, 0)))
    x_packed = x2.reshape(n_packed, R * p)

    # --- hoist the transcendental; flatten + tile the tiny parameters once.
    #     (Compute in f32; output is cast to x.dtype on store.)
    inv_s = jnp.exp(-log_s).astype(jnp.float32)
    m_row = jnp.tile(m.reshape(1, L).astype(jnp.float32), (1, R))
    inv_s_row = jnp.tile(inv_s.reshape(1, L), (1, R))

    grid = (n_packed // tile_rows,)
    kernel = functools.partial(_loc_scale_fwd_kernel, K=K, p=p, R=R)

    out = pl.pallas_call(
        kernel,
        out_shape=jax.ShapeDtypeStruct((n_packed, R * L), out_dtype),
        grid_spec=pltpu.PrefetchScalarGridSpec(
            num_scalar_prefetch=0,
            grid=grid,
            in_specs=[
                pl.BlockSpec((tile_rows, R * p), lambda i: (i, 0)),  # x block
                pl.BlockSpec((1, R * L), lambda i: (0, 0)),          # m (resident)
                pl.BlockSpec((1, R * L), lambda i: (0, 0)),          # 1/exp(log_s)
            ],
            out_specs=pl.BlockSpec((tile_rows, R * L), lambda i: (i, 0)),
        ),
        compiler_params=pltpu.CompilerParams(
            dimension_semantics=("parallel",),
        ),
    )(x_packed, m_row, inv_s_row)

    # Flat memory order of (n_packed, R*K*p) is exactly (N_pad, K, p).
    out = out.reshape(N_pad, K, p)[:N]
    return out.reshape(*batch_shape, K, p)


def location_scale_flow_forward_ref(x, m, log_s):
    # Pure-JAX reference mirroring the PyTorch module exactly.
    X = jnp.expand_dims(x, -2)                     # (..., 1, p)
    return (X - m) / jnp.exp(log_s)                # broadcast -> (..., K, p)


if __name__ == "__main__":
    K, p = 4, 16
    batch, seq = 2, 8

    key = jax.random.PRNGKey(0)
    kx, km, kx2, km2 = jax.random.split(key, 4)

    # Deterministic parameter init matching __init__:
    #   m ~ randn(K, p); log_s = zeros(K, p)
    m = jax.random.normal(km, (K, p), dtype=jnp.float32)
    log_s = jnp.zeros((K, p), dtype=jnp.float32)

    x = jax.random.normal(kx, (batch, seq, p), dtype=jnp.float32)

    out = location_scale_flow_forward(x, m, log_s)
    out = jax.block_until_ready(out)

    ref = location_scale_flow_forward_ref(x, m, log_s)
    assert out.shape == (batch, seq, K, p)
    assert jnp.allclose(out, ref, atol=1e-5, rtol=1e-5)

    # Second check: ragged batch (exercises padding) + multi-step grid
    # (exercises pipelining / megacore-parallel axis), non-zero log_s.
    m2 = jax.random.normal(km2, (K, p), dtype=jnp.float32)
    log_s2 = 0.1 * jax.random.normal(km, (K, p), dtype=jnp.float32)
    x_big = jax.random.normal(kx2, (3, 50, p), dtype=jnp.float32)

    out2 = location_scale_flow_forward(x_big, m2, log_s2, tile_rows=8)
    out2 = jax.block_until_ready(out2)
    ref2 = location_scale_flow_forward_ref(x_big, m2, log_s2)
    assert out2.shape == (3, 50, K, p)
    assert jnp.allclose(out2, ref2, atol=1e-5, rtol=1e-5)

    print("KERNEL_OK")
</pallas_src>

<mosaic_0001>
module attributes {stable_mosaic.version = 11 : i64} {
  func.func @_loc_scale_fwd_kernel(%arg0: i32, %arg1: memref<8x32xf32, #tpu.memory_space<vmem>>, %arg2: memref<1x128xf32, #tpu.memory_space<vmem>>, %arg3: memref<1x128xf32, #tpu.memory_space<vmem>>, %arg4: memref<8x128xf32, #tpu.memory_space<vmem>>) attributes {dimension_semantics = [#tpu.dimension_semantics<parallel>], iteration_bounds = array<i64: 1>, scalar_prefetch = 0 : i64, scratch_operands = 0 : i64, tpu.core_type = #tpu.core_type<tc>, window_params = [{transform_indices = @transform_0, window_bounds = array<i64: 8, 32>}, {pipeline_mode = #tpu.pipeline_mode<synchronous>, transform_indices = @transform_1, window_bounds = array<i64: 1, 128>}, {pipeline_mode = #tpu.pipeline_mode<synchronous>, transform_indices = @transform_2, window_bounds = array<i64: 1, 128>}, {transform_indices = @transform_3, window_bounds = array<i64: 8, 128>}]} {
    %c0 = arith.constant 0 : index
    %c0_0 = arith.constant 0 : index
    %0 = vector.load %arg1[%c0, %c0_0] : memref<8x32xf32, #tpu.memory_space<vmem>>, vector<8x32xf32>
    %1 = vector.extract_strided_slice %0 {offsets = [0, 0], sizes = [8, 16], strides = [1, 1]} : vector<8x32xf32> to vector<8x16xf32>
    %2 = tpu.concatenate %1, %1, %1, %1 in 1 : vector<8x16xf32>, vector<8x16xf32>, vector<8x16xf32>, vector<8x16xf32> -> vector<8x64xf32>
    %3 = vector.extract_strided_slice %0 {offsets = [0, 16], sizes = [8, 16], strides = [1, 1]} : vector<8x32xf32> to vector<8x16xf32>
    %4 = tpu.concatenate %3, %3, %3, %3 in 1 : vector<8x16xf32>, vector<8x16xf32>, vector<8x16xf32>, vector<8x16xf32> -> vector<8x64xf32>
    %5 = tpu.concatenate %2, %4 in 1 : vector<8x64xf32>, vector<8x64xf32> -> vector<8x128xf32>
    %c0_1 = arith.constant 0 : index
    %c0_2 = arith.constant 0 : index
    %6 = vector.load %arg2[%c0_1, %c0_2] : memref<1x128xf32, #tpu.memory_space<vmem>>, vector<1x128xf32>
    %7 = vector.broadcast %6 : vector<1x128xf32> to vector<8x128xf32>
    %8 = arith.subf %5, %7 : vector<8x128xf32>
    %c0_3 = arith.constant 0 : index
    %c0_4 = arith.constant 0 : index
    %9 = vector.load %arg3[%c0_3, %c0_4] : memref<1x128xf32, #tpu.memory_space<vmem>>, vector<1x128xf32>
    %10 = vector.broadcast %9 : vector<1x128xf32> to vector<8x128xf32>
    %11 = arith.mulf %8, %10 : vector<8x128xf32>
    %c0_5 = arith.constant 0 : index
    %c0_6 = arith.constant 0 : index
    %12 = vector.load %arg4[%c0_5, %c0_6] : memref<8x128xf32, #tpu.memory_space<vmem>>, vector<8x128xf32>
    tpu.vector_store %arg4[%c0_5, %c0_6], %11 {strides = array<i32>} : memref<8x128xf32, #tpu.memory_space<vmem>>, vector<8x128xf32>,
    return
  }
  func.func @transform_0(%arg0: i32) -> (i32, i32) {
    %c0_i32 = arith.constant 0 : i32
    %c0_i32_0 = arith.constant 0 : i32
    return %arg0, %c0_i32 : i32, i32
  }
  func.func @transform_1(%arg0: i32) -> (i32, i32) {
    %c0_i32 = arith.constant 0 : i32
    %c0_i32_0 = arith.constant 0 : i32
    %c0_i32_1 = arith.constant 0 : i32
    return %c0_i32, %c0_i32_0 : i32, i32
  }
  func.func @transform_2(%arg0: i32) -> (i32, i32) {
    %c0_i32 = arith.constant 0 : i32
    %c0_i32_0 = arith.constant 0 : i32
    %c0_i32_1 = arith.constant 0 : i32
    return %c0_i32, %c0_i32_0 : i32, i32
  }
  func.func @transform_3(%arg0: i32) -> (i32, i32) {
    %c0_i32 = arith.constant 0 : i32
    %c0_i32_0 = arith.constant 0 : i32
    return %arg0, %c0_i32 : i32, i32
  }
}

</mosaic_0001>

<llo_original>
// kernel: tpu_custom_call.1
$region0: #{tpu_custom_call.1}
  #allocation0 [shape = 'u32[]', space=smem, size = 0x4, offset = 0x4, fixed_abs, tag = 'smem constant byte address 0x4 - core index']
  #allocation1 [shape = 'u32[144,128]{1,0:T(1,128)}', space=vmem, size = 0x12000, scoped, tag = 'internal scratch']
  %s0 = inlined_call_operand.hbm [shape: f32[8,32], index: 0, kind: input, shape index: {}]
  %s1 = inlined_call_operand.vmem [shape: f32[1,128], index: 1, kind: input, shape index: {}]
  %s2 = inlined_call_operand.vmem [shape: f32[1,128], index: 2, kind: input, shape index: {}]
  %s3 = inlined_call_operand.hbm [shape: f32[8,128], index: 3, kind: output, shape index: {}]
  %s4 = sld [smem:[#allocation0]]
  $region26: #{tpu_custom_call.1} parent=0
    _
  %s6 = ssub.s32 1, %s4
  %s7 = scalar_select 0, %s6, %s4
  $region1: #{tpu_custom_call.1} parent=0
    #allocation2 [shape = 'u8[4096]{0}', space=vmem, size = 0x1000, scoped, tag = 'input window, operand 0, single buffered']
    #allocation3 [shape = 's32[1]{0}', space=sflag, size = 0x4, scoped, tag = 'scoped memory for tpu_custom_call.1']
    #allocation4 [shape = 's32[1]{0}', space=sflag, size = 0x4, scoped, tag = 'scoped memory for tpu_custom_call.1']
    #allocation5 [shape = 'u8[4096]{0}', space=vmem, size = 0x1000, scoped, tag = 'output window, operand 0, single buffered']
    %8 = vsyncpa [#allocation3], 0
    %9 = vsyncpa [#allocation4], 0
    // Predicated region
    $region2: #{tpu_custom_call.1} parent=1 // pred_check
      _
    $region3: #{tpu_custom_call.1} parent=1 // pred_check_branch
      %11 = sbr.rel (0) target = $region5
    $region4: #{tpu_custom_call.1} parent=1 // pred_region
      %s13 = ssub.s32 128, 128
      %14 = vsyncadd [#allocation3], %s13
      %s16 = sshll.u32 [#allocation2], 4
      %s17 = int_to_ptr.vmem [resolvable:$true] %s16
      %19 = dma.hbm_to_vmem [thread:$0]  %s0, 128, %s17, [#allocation3]
    $region5: #{tpu_custom_call.1} parent=1 // pred_fallthru
      _
    // Predicated region
    $region6: #{tpu_custom_call.1} parent=1 // pred_check
      _
    $region7: #{tpu_custom_call.1} parent=1 // pred_check_branch
      %21 = sbr.rel (0) target = $region9
    $region8: #{tpu_custom_call.1} parent=1 // pred_region
      _
    $region9: #{tpu_custom_call.1} parent=1 // pred_fallthru
      _
    // Predicated region
    $region10: #{tpu_custom_call.1} parent=1 // pred_check
      _
    $region11: #{tpu_custom_call.1} parent=1 // pred_check_branch
      %23 = sbr.rel (0) target = $region13
    $region12: #{tpu_custom_call.1} parent=1 // pred_region
      _
    $region13: #{tpu_custom_call.1} parent=1 // pred_fallthru
      _
    // Predicated region
    $region14: #{tpu_custom_call.1} parent=1 // pred_check
      _
    $region15: #{tpu_custom_call.1} parent=1 // pred_check_branch
      %25 = sbr.rel (0) target = $region17
    $region16: #{tpu_custom_call.1} parent=1 // pred_region
      %26 = dma.done [#allocation3], 128
    $region17: #{tpu_custom_call.1} parent=1 // pred_fallthru
      _
    %v27 = vld [vmem:[#allocation2] sm:$0xff]
    %29 = vrot.lane.b32.xlu0 %v27, 16
    %v30 = vpop.permute.xlu0 %29
    %32 = vrot.lane.b32.xlu0 %v27, 32
    %v33 = vpop.permute.xlu0 %32
    %35 = vrot.lane.b32.xlu0 %v27, 48
    %v36 = vpop.permute.xlu0 %35
    %vm38 = vcmask 130048
    %v39 = vsel %vm38, %v27, %v30
    %vm40 = vcmask 261120
    %v41 = vsel %vm40, %v39, %v33
    %vm42 = vcmask 392192
    %v43 = vsel %vm42, %v41, %v36
    %44 = vrot.lane.b32.xlu0 %v27, 112
    %v45 = vpop.permute.xlu0 %44
    %v47 = vsel %vm38, %v45, %v27
    %v48 = vsel %vm40, %v47, %v30
    %v49 = vsel %vm42, %v48, %v33
    %51 = vrot.lane.b32.xlu0 %v49, 64
    %v52 = vpop.permute.xlu0 %51
    %vm54 = vcmask 523264
    %v55 = vsel %vm54, %v43, %v52
    %v56 = vld [vmem:[%s1] sm:$0x1]
    %v58 = vlaneseq
    %v59 = vshrl.u32 %v58, 7
    %v60 = vsub.s32 0, %v59
    %v61 = vrot.slane %v56, %v60
    %v63 = vsub.f32 %v55, %v61
    %v64 = vld [vmem:[%s2] sm:$0x1]
    %v66 = vlaneseq
    %v67 = vshrl.u32 %v66, 7
    %v68 = vsub.s32 0, %v67
    %v69 = vrot.slane %v64, %v68
    %v71 = vmul.f32 %v63, %v69
    %72 = vst [vmem:[#allocation5] sm:$0xff] %v71
    // Predicated region
    $region18: #{tpu_custom_call.1} parent=1 // pred_check
      _
    $region19: #{tpu_custom_call.1} parent=1 // pred_check_branch
      %74 = sbr.rel (0) target = $region21
    $region20: #{tpu_custom_call.1} parent=1 // pred_region
      %s76 = ssub.s32 128, 128
      %77 = vsyncadd [#allocation4], %s76
      %s79 = sshll.u32 [#allocation5], 4
      %s80 = int_to_ptr.vmem [resolvable:$true] %s79
      %82 = dma.vmem_to_hbm [thread:$0]  %s80, 128, %s3, [#allocation4]
    $region21: #{tpu_custom_call.1} parent=1 // pred_fallthru
      _
    // Predicated region
    $region22: #{tpu_custom_call.1} parent=1 // pred_check
      _
    $region23: #{tpu_custom_call.1} parent=1 // pred_check_branch
      %84 = sbr.rel (0) target = $region25
    $region24: #{tpu_custom_call.1} parent=1 // pred_region
      %85 = dma.done [#allocation4], 128
    $region25: #{tpu_custom_call.1} parent=1 // pred_fallthru
      _
    %86 = vsyncpa [#allocation3], 1
    %87 = vsyncpa [#allocation4], 1

</llo_original>
